<compile_context>
chip_gen: v6e
topology: v6e:2x2x1
jax: 0.10.0
libtpu: 0.0.40
codegen_flags: <defaults>
</compile_context>

<pallas_src>
import functools
import math

import jax
import jax.numpy as jnp
from jax import lax
from jax.experimental import pallas as pl
from jax.experimental.pallas import tpu as pltpu

_VMEM_LIMIT = 64 * 1024 * 1024  # raise above the 16/32 MiB scoped default


# --------------------------------------------------------------------------
# Kernel 1: tiled linear projection  y = x @ W + b  (bf16 MXU, f32 accumulate)
# --------------------------------------------------------------------------
def _linear_kernel(x_ref, w_ref, b_ref, o_ref):
    x = x_ref[...].astype(jnp.bfloat16)                 # cast tile on VPU (free slot)
    acc = jnp.dot(x, w_ref[...], preferred_element_type=jnp.float32)
    o_ref[...] = (acc + b_ref[...]).astype(o_ref.dtype)


def _linear(x, w, b, *, row_tile=512, out_dtype=jnp.bfloat16):
    """x: (N, Din) f32, w: (Din, Dout) bf16, b: (1, Dout) f32 -> (N, Dout) bf16."""
    N, Din = x.shape
    Dout = w.shape[1]
    rt = min(row_tile, N)
    return pl.pallas_call(
        _linear_kernel,
        out_shape=jax.ShapeDtypeStruct((N, Dout), out_dtype),
        grid=(pl.cdiv(N, rt),),
        in_specs=[
            pl.BlockSpec((rt, Din), lambda i: (i, 0)),
            pl.BlockSpec((Din, Dout), lambda i: (0, 0)),   # weight stays VMEM-resident
            pl.BlockSpec((1, Dout), lambda i: (0, 0)),
        ],
        out_specs=pl.BlockSpec((rt, Dout), lambda i: (i, 0)),
        compiler_params=pltpu.CompilerParams(
            dimension_semantics=("parallel",),
            vmem_limit_bytes=_VMEM_LIMIT),
    )(x, w, b)


# --------------------------------------------------------------------------
# Kernel 2: attention for one (batch, head, q-tile) block
# --------------------------------------------------------------------------
def _make_attention_kernel(scale, has_mask, return_scores):
    def kernel(*refs):
        q_ref, k_ref, v_ref = refs[0], refs[1], refs[2]
        nxt = 3
        m_ref = None
        if has_mask:
            m_ref = refs[nxt]
            nxt += 1
        scores_ref = refs[nxt] if return_scores else None
        ctx_ref = refs[-1]

        # fold 1/sqrt(hd) into the q tile (f32 VPU math -> works on v5e too),
        # then hand bf16 operands to the MXU.
        q = (q_ref[0].astype(jnp.float32) * scale).astype(jnp.bfloat16)   # (qt, hd)
        k = k_ref[0]                                                      # (Sk, hd) bf16
        v = v_ref[0]                                                      # (Sk, hd) bf16

        # QK^T without an explicit transpose: contract over head_dim.
        s = lax.dot_general(q, k, (((1,), (1,)), ((), ())),
                            preferred_element_type=jnp.float32)           # (qt, Sk) f32
        if has_mask:
            s = s + m_ref[0]                                              # (1, Sk) broadcast

        if return_scores:
            scores_ref[0, 0] = s.astype(scores_ref.dtype)

        # numerically-stable softmax over keys (all f32 elementwise math)
        mx = jnp.max(s, axis=-1, keepdims=True)
        p = jnp.exp(s - mx)
        p = p * pl.reciprocal(jnp.sum(p, axis=-1, keepdims=True), approx=True)

        ctx_ref[0] = jnp.dot(p.astype(jnp.bfloat16), v,
                             preferred_element_type=jnp.float32).astype(ctx_ref.dtype)
    return kernel


# --------------------------------------------------------------------------
# Wrapper: full BertOutAttention forward
# --------------------------------------------------------------------------
def bert_out_attention(hidden_states, context, params, attention_mask=None, *,
                       num_heads, row_tile=512, q_tile=256, return_scores=True):
    """params must come from prepare_params() (bf16 weights, K|V pre-concatenated)."""
    B, Sq, H = hidden_states.shape
    _, Sk, Dc = context.shape
    assert H % num_heads == 0
    hd = H // num_heads
    scale = 1.0 / math.sqrt(hd)

    # ---- projections (bf16 intermediates; reshape back to 3D is metadata-only) ----
    q = _linear(hidden_states.reshape(B * Sq, H), params["q_w"], params["q_b"],
                row_tile=row_tile).reshape(B, Sq, H)
    kv = _linear(context.reshape(B * Sk, Dc), params["kv_w"], params["kv_b"],
                 row_tile=row_tile).reshape(B, Sk, 2 * H)

    has_mask = attention_mask is not None
    if has_mask:
        # BERT extended mask (B, 1, 1, Sk) -> (B, 1, Sk); broadcast over heads/q in-kernel.
        # TODO(synk): per-query masks (..., Sq, Sk) would need an Sq-tiled mask spec.
        mask = (jnp.broadcast_to(attention_mask, (B, 1, 1, Sk))
                   .reshape(B, 1, Sk).astype(jnp.float32))

    qt = min(q_tile, Sq)
    grid = (B, num_heads, pl.cdiv(Sq, qt))

    in_specs = [
        # Q block: rows j*qt.., head-h column slice of (B, Sq, H)
        pl.BlockSpec((1, qt, hd), lambda b, h, j: (b, j, h)),
        # K block: head-h column slice of (B, Sk, 2H); resident across q-tiles
        pl.BlockSpec((1, Sk, hd), lambda b, h, j: (b, 0, h)),
        # V block: column slice num_heads + h of (B, Sk, 2H)
        pl.BlockSpec((1, Sk, hd), lambda b, h, j: (b, 0, num_heads + h)),
    ]
    args = [q, kv, kv]
    if has_mask:
        in_specs.append(pl.BlockSpec((1, 1, Sk), lambda b, h, j: (b, 0, 0)))
        args.append(mask)

    out_shapes, out_specs = [], []
    if return_scores:
        out_shapes.append(jax.ShapeDtypeStruct((B, num_heads, Sq, Sk), jnp.float32))
        out_specs.append(pl.BlockSpec((1, 1, qt, Sk), lambda b, h, j: (b, h, j, 0)))
    # context written directly into the head's column slice -> no final transpose
    out_shapes.append(jax.ShapeDtypeStruct((B, Sq, H), jnp.float32))
    out_specs.append(pl.BlockSpec((1, qt, hd), lambda b, h, j: (b, j, h)))

    outs = pl.pallas_call(
        _make_attention_kernel(scale, has_mask, return_scores),
        out_shape=tuple(out_shapes),
        grid=grid,
        in_specs=in_specs,
        out_specs=tuple(out_specs),
        compiler_params=pltpu.CompilerParams(
            dimension_semantics=("parallel", "parallel", "parallel"),
            vmem_limit_bytes=_VMEM_LIMIT),
    )(*args)

    if return_scores:
        scores, ctx = outs
        return ctx, scores
    ctx = outs[0] if isinstance(outs, (tuple, list)) else outs
    return ctx, None


# --------------------------------------------------------------------------
# Parameters, one-time prep, and pure-JAX reference
# --------------------------------------------------------------------------
def init_params(key, hidden_size, ctx_dim):
    ks = jax.random.split(key, 6)
    # weights stored as (in, out): x @ W  ==  x @ weight.T  in PyTorch terms
    return {
        "q_w": 0.02 * jax.random.normal(ks[0], (hidden_size, hidden_size), jnp.float32),
        "q_b": 0.02 * jax.random.normal(ks[1], (1, hidden_size), jnp.float32),
        "k_w": 0.02 * jax.random.normal(ks[2], (ctx_dim, hidden_size), jnp.float32),
        "k_b": 0.02 * jax.random.normal(ks[3], (1, hidden_size), jnp.float32),
        "v_w": 0.02 * jax.random.normal(ks[4], (ctx_dim, hidden_size), jnp.float32),
        "v_b": 0.02 * jax.random.normal(ks[5], (1, hidden_size), jnp.float32),
    }


def prepare_params(params):
    """One-time prep: concatenate K|V weights/biases, cast weights to bf16."""
    return {
        "q_w": params["q_w"].astype(jnp.bfloat16),
        "q_b": params["q_b"].astype(jnp.float32),
        "kv_w": jnp.concatenate([params["k_w"], params["v_w"]],
                                axis=1).astype(jnp.bfloat16),
        "kv_b": jnp.concatenate([params["k_b"], params["v_b"]],
                                axis=1).astype(jnp.float32),
    }


def _reference(hidden_states, context, params, attention_mask, num_heads):
    B, Sq, H = hidden_states.shape
    _, Sk, _ = context.shape
    hd = H // num_heads
    q = hidden_states @ params["q_w"] + params["q_b"][0]
    k = context @ params["k_w"] + params["k_b"][0]
    v = context @ params["v_w"] + params["v_b"][0]

    def split(x, S):
        return x.reshape(B, S, num_heads, hd).transpose(0, 2, 1, 3)

    qh, kh, vh = split(q, Sq), split(k, Sk), split(v, Sk)
    scores = jnp.einsum("bhqd,bhkd->bhqk", qh, kh) / math.sqrt(hd)
    if attention_mask is not None:
        scores = scores + attention_mask
    probs = jax.nn.softmax(scores, axis=-1)
    ctx = jnp.einsum("bhqk,bhkd->bhqd", probs, vh)
    ctx = ctx.transpose(0, 2, 1, 3).reshape(B, Sq, H)
    return ctx, scores


if __name__ == "__main__":
    B, Sq, Sk = 2, 8, 16
    H, CTX_DIM, NUM_HEADS = 256, 128, 2          # head_dim = 128 (lane-dense)

    key = jax.random.PRNGKey(0)
    k_h, k_c, k_p = jax.random.split(key, 3)
    hidden_states = jax.random.normal(k_h, (B, Sq, H), jnp.float32)
    context = jax.random.normal(k_c, (B, Sk, CTX_DIM), jnp.float32)
    params = init_params(k_p, H, CTX_DIM)
    prepared = prepare_params(params)

    # BERT-style additive extended attention mask: (B, 1, 1, Sk), 0 / -10000
    lengths = jnp.array([Sk, Sk - 6], jnp.int32)
    valid = (jnp.arange(Sk)[None, :] < lengths[:, None]).astype(jnp.float32)
    attention_mask = ((1.0 - valid) * -10000.0).reshape(B, 1, 1, Sk)

    # --- masked path (returns both context_layer and attention_scores) ---
    ctx_out, scores_out = bert_out_attention(
        hidden_states, context, prepared, attention_mask, num_heads=NUM_HEADS)
    ctx_out = jax.block_until_ready(ctx_out)
    scores_out = jax.block_until_ready(scores_out)

    ctx_ref, scores_ref = _reference(
        hidden_states, context, params, attention_mask, NUM_HEADS)

    assert ctx_out.shape == (B, Sq, H)
    assert scores_out.shape == (B, NUM_HEADS, Sq, Sk)
    # bf16 MXU operands -> slightly looser tolerance than a pure-f32 pipeline
    assert jnp.allclose(scores_out, scores_ref, atol=2e-2, rtol=2e-2), \
        "attention_scores mismatch vs reference"
    assert jnp.allclose(ctx_out, ctx_ref, atol=2e-2, rtol=2e-2), \
        "context_layer mismatch vs reference"

    # --- no-mask, context-only path (no zeros-mask DMA, no scores HBM writes) ---
    ctx_nm, _ = bert_out_attention(
        hidden_states, context, prepared, None,
        num_heads=NUM_HEADS, return_scores=False)
    ctx_nm = jax.block_until_ready(ctx_nm)
    ctx_ref_nm, _ = _reference(hidden_states, context, params, None, NUM_HEADS)
    assert jnp.allclose(ctx_nm, ctx_ref_nm, atol=2e-2, rtol=2e-2), \
        "no-mask context_layer mismatch vs reference"

    print("KERNEL_OK")
</pallas_src>

<mosaic_0001>
module attributes {stable_mosaic.version = 11 : i64} {
  func.func @_linear_kernel(%arg0: i32, %arg1: memref<16x256xf32, #tpu.memory_space<vmem>>, %arg2: memref<256x256xbf16, #tpu.memory_space<vmem>>, %arg3: memref<1x256xf32, #tpu.memory_space<vmem>>, %arg4: memref<16x256xbf16, #tpu.memory_space<vmem>>) attributes {dimension_semantics = [#tpu.dimension_semantics<parallel>], iteration_bounds = array<i64: 1>, scalar_prefetch = 0 : i64, scratch_operands = 0 : i64, tpu.core_type = #tpu.core_type<tc>, window_params = [{transform_indices = @transform_0, window_bounds = array<i64: 16, 256>}, {pipeline_mode = #tpu.pipeline_mode<synchronous>, transform_indices = @transform_1, window_bounds = array<i64: 256, 256>}, {pipeline_mode = #tpu.pipeline_mode<synchronous>, transform_indices = @transform_2, window_bounds = array<i64: 1, 256>}, {transform_indices = @transform_3, window_bounds = array<i64: 16, 256>}]} {
    %c0 = arith.constant 0 : index
    %c0_0 = arith.constant 0 : index
    %0 = vector.load %arg1[%c0, %c0_0] : memref<16x256xf32, #tpu.memory_space<vmem>>, vector<16x256xf32>
    %1 = arith.truncf %0 : vector<16x256xf32> to vector<16x256xbf16>
    %c0_1 = arith.constant 0 : index
    %c0_2 = arith.constant 0 : index
    %2 = vector.load %arg2[%c0_1, %c0_2] : memref<256x256xbf16, #tpu.memory_space<vmem>>, vector<256x256xbf16>
    %cst = arith.constant dense<0.000000e+00> : vector<16x256xf32>
    %3 = tpu.matmul %1, %2, %cst {dimension_numbers = #tpu.dot_dimension_numbers<[1], [0], [0], [1], [0, 0, 1, 1], [], []>} : vector<16x256xbf16>, vector<256x256xbf16>, vector<16x256xf32> -> vector<16x256xf32>
    %c0_3 = arith.constant 0 : index
    %c0_4 = arith.constant 0 : index
    %4 = vector.load %arg3[%c0_3, %c0_4] : memref<1x256xf32, #tpu.memory_space<vmem>>, vector<1x256xf32>
    %5 = vector.broadcast %4 : vector<1x256xf32> to vector<16x256xf32>
    %6 = arith.addf %3, %5 : vector<16x256xf32>
    %7 = arith.truncf %6 : vector<16x256xf32> to vector<16x256xbf16>
    %c0_5 = arith.constant 0 : index
    %c0_6 = arith.constant 0 : index
    %8 = vector.load %arg4[%c0_5, %c0_6] : memref<16x256xbf16, #tpu.memory_space<vmem>>, vector<16x256xbf16>
    tpu.vector_store %arg4[%c0_5, %c0_6], %7 {strides = array<i32>} : memref<16x256xbf16, #tpu.memory_space<vmem>>, vector<16x256xbf16>,
    return
  }
  func.func @transform_0(%arg0: i32) -> (i32, i32) {
    %c0_i32 = arith.constant 0 : i32
    %c0_i32_0 = arith.constant 0 : i32
    return %arg0, %c0_i32 : i32, i32
  }
  func.func @transform_1(%arg0: i32) -> (i32, i32) {
    %c0_i32 = arith.constant 0 : i32
    %c0_i32_0 = arith.constant 0 : i32
    %c0_i32_1 = arith.constant 0 : i32
    return %c0_i32, %c0_i32_0 : i32, i32
  }
  func.func @transform_2(%arg0: i32) -> (i32, i32) {
    %c0_i32 = arith.constant 0 : i32
    %c0_i32_0 = arith.constant 0 : i32
    %c0_i32_1 = arith.constant 0 : i32
    return %c0_i32, %c0_i32_0 : i32, i32
  }
  func.func @transform_3(%arg0: i32) -> (i32, i32) {
    %c0_i32 = arith.constant 0 : i32
    %c0_i32_0 = arith.constant 0 : i32
    return %arg0, %c0_i32 : i32, i32
  }
}

</mosaic_0001>

<llo_original>
// kernel: tpu_custom_call.1
$region0: #{tpu_custom_call.1}
  #allocation0 [shape = 'u32[]', space=smem, size = 0x4, offset = 0x4, fixed_abs, tag = 'smem constant byte address 0x4 - core index']
  #allocation1 [shape = 'u32[144,128]{1,0:T(1,128)}', space=vmem, size = 0x12000, scoped, tag = 'internal scratch']
  %s0 = inlined_call_operand.hbm [shape: f32[16,256], index: 0, kind: input, shape index: {}]
  %s1 = inlined_call_operand.hbm [shape: bf16[256,256], index: 1, kind: input, shape index: {}]
  %s2 = inlined_call_operand.vmem [shape: f32[1,256], index: 2, kind: input, shape index: {}]
  %s3 = inlined_call_operand.hbm [shape: bf16[16,256], index: 3, kind: output, shape index: {}]
  %s4 = sld [smem:[#allocation0]]
  $region30: #{tpu_custom_call.1} parent=0
    _
  %s6 = ssub.s32 1, %s4
  %s7 = scalar_select 0, %s6, %s4
  $region1: #{tpu_custom_call.1} parent=0
    #allocation2 [shape = 'u8[16384]{0}', space=vmem, size = 0x4000, scoped, tag = 'input window, operand 0, single buffered']
    #allocation3 [shape = 's32[1]{0}', space=sflag, size = 0x4, scoped, tag = 'scoped memory for tpu_custom_call.1']
    #allocation4 [shape = 's32[1]{0}', space=sflag, size = 0x4, scoped, tag = 'scoped memory for tpu_custom_call.1']
    #allocation5 [shape = 'u8[131072]{0}', space=vmem, size = 0x20000, scoped, tag = 'input window, operand 1, single buffered']
    #allocation6 [shape = 's32[1]{0}', space=sflag, size = 0x4, scoped, tag = 'scoped memory for tpu_custom_call.1']
    #allocation7 [shape = 'u8[8192]{0}', space=vmem, size = 0x2000, scoped, tag = 'output window, operand 0, single buffered']
    %8 = vsyncpa [#allocation3], 0
    %9 = vsyncpa [#allocation6], 0
    %10 = vsyncpa [#allocation4], 0
    // Predicated region
    $region2: #{tpu_custom_call.1} parent=1 // pred_check
      _
    $region3: #{tpu_custom_call.1} parent=1 // pred_check_branch
      %12 = sbr.rel (0) target = $region5
    $region4: #{tpu_custom_call.1} parent=1 // pred_region
      %s14 = ssub.s32 512, 512
      %15 = vsyncadd [#allocation3], %s14
      %s16 = sshll.u32 [#allocation2], 4
      %s17 = int_to_ptr.vmem [resolvable:$true] %s16
      %22 = dma.hbm_to_vmem [thread:$0]  %s0, 512, %s17, [#allocation3], 256, 256, 16
    $region5: #{tpu_custom_call.1} parent=1 // pred_fallthru
      _
    // Predicated region
    $region6: #{tpu_custom_call.1} parent=1 // pred_check
      _
    $region7: #{tpu_custom_call.1} parent=1 // pred_check_branch
      %24 = sbr.rel (0) target = $region9
    $region8: #{tpu_custom_call.1} parent=1 // pred_region
      %s26 = ssub.s32 4096, 4096
      %27 = vsyncadd [#allocation6], %s26
      %s28 = sshll.u32 [#allocation5], 4
      %s29 = int_to_ptr.vmem [resolvable:$true] %s28
      %34 = dma.hbm_to_vmem [thread:$0]  %s1, 4096, %s29, [#allocation6], 128, 128, 8
    $region9: #{tpu_custom_call.1} parent=1 // pred_fallthru
      _
    // Predicated region
    $region10: #{tpu_custom_call.1} parent=1 // pred_check
      _
    $region11: #{tpu_custom_call.1} parent=1 // pred_check_branch
      %36 = sbr.rel (0) target = $region13
    $region12: #{tpu_custom_call.1} parent=1 // pred_region
      _
    $region13: #{tpu_custom_call.1} parent=1 // pred_fallthru
      _
    // Predicated region
    $region14: #{tpu_custom_call.1} parent=1 // pred_check
      _
    $region15: #{tpu_custom_call.1} parent=1 // pred_check_branch
      %38 = sbr.rel (0) target = $region17
    $region16: #{tpu_custom_call.1} parent=1 // pred_region
      %39 = dma.done [#allocation3], 512
    $region17: #{tpu_custom_call.1} parent=1 // pred_fallthru
      _
    // Predicated region
    $region18: #{tpu_custom_call.1} parent=1 // pred_check
      _
    $region19: #{tpu_custom_call.1} parent=1 // pred_check_branch
      %41 = sbr.rel (0) target = $region21
    $region20: #{tpu_custom_call.1} parent=1 // pred_region
      %42 = dma.done [#allocation6], 4096
    $region21: #{tpu_custom_call.1} parent=1 // pred_fallthru
      _
    %v43 = vld [vmem:[#allocation2] sm:$0xff]
    %v44 = vld [vmem:[#allocation2 + $0x8] sm:$0xff]
    %v45 = vld [vmem:[#allocation2 + $0x10] sm:$0xff]
    %v46 = vld [vmem:[#allocation2 + $0x18] sm:$0xff]
    %v47 = vpack.c.bf16 %v45, %v43
    %v48 = vpack.c.bf16 %v46, %v44
    %v49 = vld [vmem:[#allocation5] sm:$0xff]
    %v50 = vld [vmem:[#allocation5 + $0x8] sm:$0xff]
    %v51 = vld [vmem:[#allocation5 + $0x10] sm:$0xff]
    %v52 = vld [vmem:[#allocation5 + $0x18] sm:$0xff]
    %v53 = vld [vmem:[#allocation5 + $0x20] sm:$0xff]
    %v54 = vld [vmem:[#allocation5 + $0x28] sm:$0xff]
    %v55 = vld [vmem:[#allocation5 + $0x30] sm:$0xff]
    %v56 = vld [vmem:[#allocation5 + $0x38] sm:$0xff]
    %v57 = vld [vmem:[#allocation5 + $0x40] sm:$0xff]
    %v58 = vld [vmem:[#allocation5 + $0x48] sm:$0xff]
    %v59 = vld [vmem:[#allocation5 + $0x50] sm:$0xff]
    %v60 = vld [vmem:[#allocation5 + $0x58] sm:$0xff]
    %v61 = vld [vmem:[#allocation5 + $0x60] sm:$0xff]
    %v62 = vld [vmem:[#allocation5 + $0x68] sm:$0xff]
    %v63 = vld [vmem:[#allocation5 + $0x70] sm:$0xff]
    %v64 = vld [vmem:[#allocation5 + $0x78] sm:$0xff]
    %v65 = vld [vmem:[#allocation5 + $0x80] sm:$0xff]
    %v66 = vld [vmem:[#allocation5 + $0x88] sm:$0xff]
    %v67 = vld [vmem:[#allocation5 + $0x90] sm:$0xff]
    %v68 = vld [vmem:[#allocation5 + $0x98] sm:$0xff]
    %v69 = vld [vmem:[#allocation5 + $0xa0] sm:$0xff]
    %v70 = vld [vmem:[#allocation5 + $0xa8] sm:$0xff]
    %v71 = vld [vmem:[#allocation5 + $0xb0] sm:$0xff]
    %v72 = vld [vmem:[#allocation5 + $0xb8] sm:$0xff]
    %v73 = vld [vmem:[#allocation5 + $0xc0] sm:$0xff]
    %v74 = vld [vmem:[#allocation5 + $0xc8] sm:$0xff]
    %v75 = vld [vmem:[#allocation5 + $0xd0] sm:$0xff]
    %v76 = vld [vmem:[#allocation5 + $0xd8] sm:$0xff]
    %v77 = vld [vmem:[#allocation5 + $0xe0] sm:$0xff]
    %v78 = vld [vmem:[#allocation5 + $0xe8] sm:$0xff]
    %v79 = vld [vmem:[#allocation5 + $0xf0] sm:$0xff]
    %v80 = vld [vmem:[#allocation5 + $0xf8] sm:$0xff]
    %v81 = vld [vmem:[%s2] sm:$0x3]
    %v83 = vlaneseq
    %v84 = vshrl.u32 %v83, 7
    %v85 = vsub.s32 0, %v84
    %v86 = vrot.slane %v81, %v85
    %v87 = vlaneseq
    %v88 = vshrl.u32 %v87, 7
    %v89 = vsub.s32 1, %v88
    %v90 = vrot.slane %v81, %v89
    %v125 = vunpack.c.l.b16 %v49
    %v126 = vunpack.c.h.b16 %v49
    %v127 = vunpack.c.l.b16 %v50
    %v128 = vunpack.c.h.b16 %v50
    %v129 = vunpack.c.l.b16 %v51
    %v130 = vunpack.c.h.b16 %v51
    %v131 = vunpack.c.l.b16 %v52
    %v132 = vunpack.c.h.b16 %v52
    %v133 = vunpack.c.l.b16 %v53
    %v134 = vunpack.c.h.b16 %v53
    %v135 = vunpack.c.l.b16 %v54
    %v136 = vunpack.c.h.b16 %v54
    %v137 = vunpack.c.l.b16 %v55
    %v138 = vunpack.c.h.b16 %v55
    %v139 = vunpack.c.l.b16 %v56
    %v140 = vunpack.c.h.b16 %v56
    %v141 = vunpack.c.l.b16 %v57
    %v142 = vunpack.c.h.b16 %v57
    %v143 = vunpack.c.l.b16 %v58
    %v144 = vunpack.c.h.b16 %v58
    %v145 = vunpack.c.l.b16 %v59
    %v146 = vunpack.c.h.b16 %v59
    %v147 = vunpack.c.l.b16 %v60
    %v148 = vunpack.c.h.b16 %v60
    %v149 = vunpack.c.l.b16 %v61
    %v150 = vunpack.c.h.b16 %v61
    %v151 = vunpack.c.l.b16 %v62
    %v152 = vunpack.c.h.b16 %v62
    %v153 = vunpack.c.l.b16 %v63
    %v154 = vunpack.c.h.b16 %v63
    %v155 = vunpack.c.l.b16 %v64
    %v156 = vunpack.c.h.b16 %v64
    %v157 = vunpack.c.l.b16 %v65
    %v158 = vunpack.c.h.b16 %v65
    %v159 = vunpack.c.l.b16 %v66
    %v160 = vunpack.c.h.b16 %v66
    %v161 = vunpack.c.l.b16 %v67
    %v162 = vunpack.c.h.b16 %v67
    %v163 = vunpack.c.l.b16 %v68
    %v164 = vunpack.c.h.b16 %v68
    %v165 = vunpack.c.l.b16 %v69
    %v166 = vunpack.c.h.b16 %v69
    %v167 = vunpack.c.l.b16 %v70
    %v168 = vunpack.c.h.b16 %v70
    %v169 = vunpack.c.l.b16 %v71
    %v170 = vunpack.c.h.b16 %v71
    %v171 = vunpack.c.l.b16 %v72
    %v172 = vunpack.c.h.b16 %v72
    %v173 = vunpack.c.l.b16 %v73
    %v174 = vunpack.c.h.b16 %v73
    %v175 = vunpack.c.l.b16 %v74
    %v176 = vunpack.c.h.b16 %v74
    %v177 = vunpack.c.l.b16 %v75
    %v178 = vunpack.c.h.b16 %v75
    %v179 = vunpack.c.l.b16 %v76
    %v180 = vunpack.c.h.b16 %v76
    %v181 = vunpack.c.l.b16 %v77
    %v182 = vunpack.c.h.b16 %v77
    %v183 = vunpack.c.l.b16 %v78
    %v184 = vunpack.c.h.b16 %v78
    %v185 = vunpack.c.l.b16 %v79
    %v186 = vunpack.c.h.b16 %v79
    %v187 = vunpack.c.l.b16 %v80
    %v188 = vunpack.c.h.b16 %v80
    %v189 = vpack.c.b16 %v127, %v125
    %v190 = vpack.c.b16 %v128, %v126
    %v191 = vpack.c.b16 %v131, %v129
    %v192 = vpack.c.b16 %v132, %v130
    %v193 = vpack.c.b16 %v135, %v133
    %v194 = vpack.c.b16 %v136, %v134
    %v195 = vpack.c.b16 %v139, %v137
    %v196 = vpack.c.b16 %v140, %v138
    %v197 = vpack.c.b16 %v143, %v141
    %v198 = vpack.c.b16 %v144, %v142
    %v199 = vpack.c.b16 %v147, %v145
    %v200 = vpack.c.b16 %v148, %v146
    %v201 = vpack.c.b16 %v151, %v149
    %v202 = vpack.c.b16 %v152, %v150
    %v203 = vpack.c.b16 %v155, %v153
    %v204 = vpack.c.b16 %v156, %v154
    %v205 = vpack.c.b16 %v159, %v157
    %v206 = vpack.c.b16 %v160, %v158
    %v207 = vpack.c.b16 %v163, %v161
    %v208 = vpack.c.b16 %v164, %v162
    %v209 = vpack.c.b16 %v167, %v165
    %v210 = vpack.c.b16 %v168, %v166
    %v211 = vpack.c.b16 %v171, %v169
    %v212 = vpack.c.b16 %v172, %v170
    %v213 = vpack.c.b16 %v175, %v173
    %v214 = vpack.c.b16 %v176, %v174
    %v215 = vpack.c.b16 %v179, %v177
    %v216 = vpack.c.b16 %v180, %v178
    %v217 = vpack.c.b16 %v183, %v181
    %v218 = vpack.c.b16 %v184, %v182
    %v219 = vpack.c.b16 %v187, %v185
    %v220 = vpack.c.b16 %v188, %v186
    %253 = vmatprep.subr.bf16.mxu0 %v204
    %254 = vmatpush1.bf16.msra.mxu0 %v203
    %255 = vmatprep.subr.bf16.mxu0 %v202
    %256 = vmatpush1.bf16.msra.mxu0 %v201
    %257 = vmatprep.subr.bf16.mxu0 %v200
    %258 = vmatpush1.bf16.msra.mxu0 %v199
    %259 = vmatprep.subr.bf16.mxu0 %v198
    %260 = vmatpush1.bf16.msra.mxu0 %v197
    %261 = vmatprep.subr.bf16.mxu0 %v196
    %262 = vmatpush1.bf16.msra.mxu0 %v195
    %263 = vmatprep.subr.bf16.mxu0 %v194
    %264 = vmatpush1.bf16.msra.mxu0 %v193
    %265 = vmatprep.subr.bf16.mxu0 %v192
    %266 = vmatpush1.bf16.msra.mxu0 %v191
    %267 = vmatprep.subr.bf16.mxu0 %v190
    %268 = vmatpush1.bf16.msra.mxu0 %v189
    %269 = vmatprep.subr.bf16.mxu0 %v220
    %270 = vmatpush2.bf16.msra.mxu0 %v219
    %271 = vmatprep.subr.bf16.mxu0 %v218
    %272 = vmatpush2.bf16.msra.mxu0 %v217
    %273 = vmatprep.subr.bf16.mxu0 %v216
    %274 = vmatpush2.bf16.msra.mxu0 %v215
    %275 = vmatprep.subr.bf16.mxu0 %v214
    %276 = vmatpush2.bf16.msra.mxu0 %v213
    %277 = vmatprep.subr.bf16.mxu0 %v212
    %278 = vmatpush2.bf16.msra.mxu0 %v211
    %279 = vmatprep.subr.bf16.mxu0 %v210
    %280 = vmatpush2.bf16.msra.mxu0 %v209
    %281 = vmatprep.subr.bf16.mxu0 %v208
    %282 = vmatpush2.bf16.msra.mxu0 %v207
    %283 = vmatprep.subr.bf16.mxu0 %v206
    %284 = vmatpush2.bf16.msra.mxu0 %v205
    %285 = vmatprep.mubr.bf16.mxu0 %v48
    %286 = vmatmul.mubr.bf16.gmra.mxu0 %v47
    %v287 = vpop.f32.mrf.mxu0
    %v288 = vadd.f32 %v86, %v287
    %v289 = vpop.f32.mrf.mxu0
    %v290 = vadd.f32 %v90, %v289
    %v291 = vpop.f32.mrf.mxu0
    %v292 = vadd.f32 %v86, %v291
    %v293 = vpop.f32.mrf.mxu0
    %v294 = vadd.f32 %v90, %v293
    %295 = vdwg.mxu0
    %v296 = vpack.c.bf16 %v292, %v288
    %v297 = vpack.c.bf16 %v294, %v290
    %v300 = vunpack.c.l.b16 %v296
    %v301 = vunpack.c.l.b16 %v297
    %v302 = vunpack.c.h.b16 %v296
    %v303 = vunpack.c.h.b16 %v297
    %v304 = vpack.c.b16 %v301, %v300
    %v305 = vpack.c.b16 %v303, %v302
    %308 = vst [vmem:[#allocation7] sm:$0xff] %v304
    %309 = vst [vmem:[#allocation7 + $0x8] sm:$0xff] %v305
    // Predicated region
    $region22: #{tpu_custom_call.1} parent=1 // pred_check
      _
    $region23: #{tpu_custom_call.1} parent=1 // pred_check_branch
      %311 = sbr.rel (0) target = $region25
    $region24: #{tpu_custom_call.1} parent=1 // pred_region
      %s313 = ssub.s32 256, 256
      %314 = vsyncadd [#allocation4], %s313
      %s315 = sshll.u32 [#allocation7], 4
      %s316 = int_to_ptr.vmem [resolvable:$true] %s315
      %321 = dma.vmem_to_hbm [thread:$0]  %s316, 256, %s3, [#allocation4], 128, 128, 8
    $region25: #{tpu_custom_call.1} parent=1 // pred_fallthru
      _
    // Predicated region
    $region26: #{tpu_custom_call.1} parent=1 // pred_check
      _
    $region27: #{tpu_custom_call.1} parent=1 // pred_check_branch
      %323 = sbr.rel (0) target = $region29
    $region28: #{tpu_custom_call.1} parent=1 // pred_region
      %324 = dma.done [#allocation4], 256
    $region29: #{tpu_custom_call.1} parent=1 // pred_fallthru
      _
    %325 = vsyncpa [#allocation3], 1
    %326 = vsyncpa [#allocation6], 1
    %327 = vsyncpa [#allocation4], 1

</llo_original>
